<compile_context>
chip_gen: v6e
topology: v6e:2x2x1
jax: 0.10.0
libtpu: 0.0.40
codegen_flags: <defaults>
</compile_context>

<pallas_src>
import functools

import jax
import jax.numpy as jnp
from jax.experimental import pallas as pl
from jax.experimental.pallas import tpu as pltpu


def _round_up(x: int, m: int) -> int:
    return (x + m - 1) // m * m


@functools.lru_cache(maxsize=1)
def _default_vmem_budget() -> int:
    """~75% of this chip's VMEM (96 MiB on v5e/v6e, 48 MiB on v7x)."""
    cap = None
    try:
        info = pltpu.get_tpu_info()
        cap = getattr(info, "vmem_capacity_bytes", None)
    except Exception:
        cap = None
    if not cap:
        cap = 64 * 1024 * 1024  # conservative fallback: v7x per-core VMEM
    return int(cap) * 3 // 4


def _tile_f_candidates(f_pad: int):
    """Descending out-feature tile sizes dividing f_pad; prefer x256 (MXU width)."""
    divs = [d for d in range(f_pad - 128, 127, -128) if f_pad % d == 0]
    pref = [d for d in divs if d % 256 == 0]
    rest = [d for d in divs if d % 256 != 0]
    return [f_pad] + pref + rest


def _tile_k_candidates(in_feats: int):
    """Descending K tile sizes (>=512, x128, dividing in_feats); whole K first."""
    cands = [in_feats]
    if in_feats % 128 == 0:
        cands += [d for d in range(in_feats - 128, 511, -128) if in_feats % d == 0]
    return cands


def _make_kernel(activation, compute_dtype, multi_k):
    if activation not in (None, "relu"):
        # TODO(synk): arbitrary Python activation callables (the module's
        # `activation` arg) are not representable in-kernel; only None / ReLU.
        raise ValueError(f"unsupported activation: {activation!r}")

    def _epilogue(acc_f32, b_f32):
        y = acc_f32 + b_f32
        if activation == "relu":
            y = jnp.maximum(y, 0.0)
        return y

    if not multi_k:
        def kernel(h_ref, w_ref, b_ref, o_ref):
            h = h_ref[...].astype(compute_dtype)        # in-kernel cast (no HBM pass)
            acc = jnp.dot(h, w_ref[...], preferred_element_type=jnp.float32)
            o_ref[...] = _epilogue(acc, b_ref[...]).astype(o_ref.dtype)
        return kernel

    def kernel(h_ref, w_ref, b_ref, o_ref, acc_ref):
        k = pl.program_id(2)

        @pl.when(k == 0)
        def _():
            acc_ref[...] = jnp.zeros_like(acc_ref)

        h = h_ref[...].astype(compute_dtype)
        acc_ref[...] += jnp.dot(h, w_ref[...], preferred_element_type=jnp.float32)

        @pl.when(k == pl.num_programs(2) - 1)
        def _():
            o_ref[...] = _epilogue(acc_ref[...], b_ref[...]).astype(o_ref.dtype)

    return kernel


def prepare_node_apply_params(weight, bias, *, compute_dtype=None):
    """One-time parameter prep (at module-init time, NOT per forward call).

    weight: (out_feats, in_feats) torch nn.Linear layout; bias: (out_feats,).
    Returns (w_t, b2, in_feats, out_feats): w_t is (in_feats, F_pad) in the
    compute dtype with F_pad = out_feats rounded up to 128 (no K padding);
    b2 is (1, F_pad) float32.
    """
    out_feats, in_feats = weight.shape
    dt = jnp.dtype(compute_dtype) if compute_dtype is not None else jnp.dtype(weight.dtype)
    f_pad = _round_up(out_feats, 128)
    w_t = jnp.asarray(weight).T.astype(dt)
    b2 = jnp.asarray(bias).astype(jnp.float32).reshape(1, out_feats)
    if f_pad != out_feats:
        w_t = jnp.pad(w_t, ((0, 0), (0, f_pad - out_feats)))
        b2 = jnp.pad(b2, ((0, 0), (0, f_pad - out_feats)))
    return w_t, b2, in_feats, out_feats


def node_apply(h, w_t, b2, out_feats, *, activation="relu",
               tile_n=None, out_dtype=None, vmem_budget_bytes=None):
    """h: (N, in_feats) -- any float dtype (best: already in the compute dtype).

    w_t / b2 come from prepare_node_apply_params.  Output dtype defaults to the
    compute dtype (= w_t.dtype); pass out_dtype=jnp.float32 to force f32 out.
    """
    n, in_feats = h.shape
    k_w, f_pad = w_t.shape
    assert k_w == in_feats, "w_t must be (in_feats, F_pad) from prepare_node_apply_params"
    compute_dtype = w_t.dtype
    out_dtype = jnp.dtype(out_dtype) if out_dtype is not None else jnp.dtype(compute_dtype)

    if vmem_budget_bytes is None:
        vmem_budget_bytes = _default_vmem_budget()

    h_item = jnp.dtype(h.dtype).itemsize
    w_item = jnp.dtype(compute_dtype).itemsize
    o_item = out_dtype.itemsize

    # ---------------- tile selection -----------------------------------------
    if tile_n is None:
        tile_n = 2048 if in_feats <= 256 else 512     # small K: amortize step cost
    tile_n = _round_up(max(8, int(tile_n)), 8)
    tile_n = min(tile_n, _round_up(n, 8))             # never allocate past the data

    tf_cands = _tile_f_candidates(f_pad)
    tk_cands = _tile_k_candidates(in_feats)

    def vmem_bytes(tn, tk, tf, multi_k):
        b = (2 * tn * tk * h_item       # activation tiles (double-buffered)
             + 2 * tk * tf * w_item     # weight tiles
             + 2 * 8 * tf * 4           # bias (sublane-padded)
             + 2 * tn * tf * o_item)    # output tiles
        if multi_k:
            b += tn * tf * 4            # f32 accumulator scratch
        return b

    fi = ki = 0
    TILE_N_FLOOR = 128                  # never starve the MXU with tiny row tiles
    while vmem_bytes(tile_n, tk_cands[ki], tf_cands[fi], ki > 0) > vmem_budget_bytes:
        if fi + 1 < len(tf_cands) and tf_cands[fi] > 512:
            fi += 1                     # 1) shrink the out-feature tile
        elif ki + 1 < len(tk_cands):
            ki += 1                     # 2) tile the reduction (K) axis
        elif tile_n > TILE_N_FLOOR:
            tile_n = _round_up(max(TILE_N_FLOOR, tile_n // 2), 8)   # 3) shrink rows
        elif fi + 1 < len(tf_cands):
            fi += 1
        else:
            break
    tile_f = tf_cands[fi]
    tile_k = tk_cands[ki]

    n_i = pl.cdiv(n, tile_n)            # ragged last row tile handled by Pallas
    n_j = f_pad // tile_f
    n_k = in_feats // tile_k
    multi_k = n_k > 1

    kernel = _make_kernel(activation, compute_dtype, multi_k)
    scratch = [pltpu.VMEM((tile_n, tile_f), jnp.float32)] if multi_k else []

    cost = pl.CostEstimate(
        flops=2 * n * in_feats * f_pad,
        transcendentals=0,
        bytes_accessed=(n * in_feats * h_item + in_feats * f_pad * w_item
                        + f_pad * 4 + n * f_pad * o_item),
    )

    out = pl.pallas_call(
        kernel,
        out_shape=jax.ShapeDtypeStruct((n, f_pad), out_dtype),
        grid_spec=pltpu.PrefetchScalarGridSpec(
            num_scalar_prefetch=0,
            grid=(n_i, n_j, n_k),
            in_specs=[
                pl.BlockSpec((tile_n, tile_k), lambda i, j, k: (i, k)),
                pl.BlockSpec((tile_k, tile_f), lambda i, j, k: (k, j)),
                pl.BlockSpec((1, tile_f), lambda i, j, k: (0, j)),
            ],
            out_specs=pl.BlockSpec((tile_n, tile_f), lambda i, j, k: (i, j)),
            scratch_shapes=scratch,
        ),
        compiler_params=pltpu.CompilerParams(
            # Rows parallel (megacore splits on i -> h streamed once per core).
            dimension_semantics=("parallel", "arbitrary", "arbitrary"),
            vmem_limit_bytes=vmem_budget_bytes + 8 * 1024 * 1024,
        ),
        cost_estimate=cost,
    )(h, w_t, b2)

    if f_pad != out_feats:              # only the non-x128 case pays a slice pass
        out = out[:, :out_feats]
    return out


def node_apply_ref(h, weight, bias, activation="relu"):
    y = jnp.dot(h.astype(jnp.float32), weight.T.astype(jnp.float32),
                precision=jax.lax.Precision.HIGHEST) + bias.astype(jnp.float32)
    if activation == "relu":
        y = jnp.maximum(y, 0.0)
    return y


if __name__ == "__main__":
    key = jax.random.PRNGKey(0)
    keys = jax.random.split(key, 9)

    # --- case 1: small f32, shapes straight from the module -------------------
    N, IN, OUT = 16, 32, 32
    h = jax.random.normal(keys[0], (N, IN), dtype=jnp.float32)
    w = jax.random.normal(keys[1], (OUT, IN), dtype=jnp.float32) * 0.1
    b = jax.random.normal(keys[2], (OUT,), dtype=jnp.float32) * 0.1
    w_t, b2, _, _ = prepare_node_apply_params(w, b)            # once, at init time
    out1 = jax.block_until_ready(node_apply(h, w_t, b2, OUT))
    ref1 = node_apply_ref(h, w, b)
    assert out1.shape == (N, OUT)
    assert jnp.allclose(out1, ref1, atol=1e-2, rtol=1e-2), "case 1 mismatch"

    # --- case 2: ragged N, non-128 dims, bf16 compute, bf16 out (default) -----
    N2, IN2, OUT2 = 40, 24, 48
    h2 = jax.random.normal(keys[3], (N2, IN2), dtype=jnp.float32)
    w2 = jax.random.normal(keys[4], (OUT2, IN2), dtype=jnp.float32) * 0.1
    b2_ = jax.random.normal(keys[5], (OUT2,), dtype=jnp.float32) * 0.1
    w_t2, bb2, _, _ = prepare_node_apply_params(w2, b2_, compute_dtype=jnp.bfloat16)
    out2 = jax.block_until_ready(node_apply(h2, w_t2, bb2, OUT2))
    ref2 = node_apply_ref(h2, w2, b2_)
    assert out2.shape == (N2, OUT2) and out2.dtype == jnp.bfloat16
    assert jnp.allclose(out2.astype(jnp.float32), ref2, atol=3e-2, rtol=3e-2), "case 2 mismatch"

    # --- case 3: 128-aligned F (no output slice), multiple ragged row tiles ---
    N3, IN3, OUT3 = 300, 256, 128
    h3 = jax.random.normal(keys[6], (N3, IN3), dtype=jnp.float32)
    w3 = jax.random.normal(keys[7], (OUT3, IN3), dtype=jnp.float32) * 0.05
    b3 = jax.random.normal(keys[8], (OUT3,), dtype=jnp.float32) * 0.1
    w_t3, bb3, _, _ = prepare_node_apply_params(w3, b3)
    out3 = jax.block_until_ready(node_apply(h3, w_t3, bb3, OUT3, tile_n=128))
    ref3 = node_apply_ref(h3, w3, b3)
    assert out3.shape == (N3, OUT3)
    assert jnp.allclose(out3, ref3, atol=1e-2, rtol=1e-2), "case 3 mismatch"

    print("KERNEL_OK")
</pallas_src>

<mosaic_0001>
module attributes {stable_mosaic.version = 11 : i64} {
  func.func @kernel(%arg0: i32, %arg1: i32, %arg2: i32, %arg3: memref<16x32xf32, #tpu.memory_space<vmem>>, %arg4: memref<32x128xf32, #tpu.memory_space<vmem>>, %arg5: memref<1x128xf32, #tpu.memory_space<vmem>>, %arg6: memref<16x128xf32, #tpu.memory_space<vmem>>) attributes {dimension_semantics = [#tpu.dimension_semantics<parallel>, #tpu.dimension_semantics<arbitrary>, #tpu.dimension_semantics<arbitrary>], iteration_bounds = array<i64: 1, 1, 1>, scalar_prefetch = 0 : i64, scratch_operands = 0 : i64, tpu.core_type = #tpu.core_type<tc>, window_params = [{transform_indices = @transform_0, window_bounds = array<i64: 16, 32>}, {transform_indices = @transform_1, window_bounds = array<i64: 32, 128>}, {transform_indices = @transform_2, window_bounds = array<i64: 1, 128>}, {transform_indices = @transform_3, window_bounds = array<i64: 16, 128>}]} {
    %c0 = arith.constant 0 : index
    %c0_0 = arith.constant 0 : index
    %0 = vector.load %arg3[%c0, %c0_0] : memref<16x32xf32, #tpu.memory_space<vmem>>, vector<16x32xf32>
    %c0_1 = arith.constant 0 : index
    %c0_2 = arith.constant 0 : index
    %1 = vector.load %arg4[%c0_1, %c0_2] : memref<32x128xf32, #tpu.memory_space<vmem>>, vector<32x128xf32>
    %cst = arith.constant dense<0.000000e+00> : vector<16x128xf32>
    %2 = tpu.matmul %0, %1, %cst {dimension_numbers = #tpu.dot_dimension_numbers<[1], [0], [0], [1], [0, 0, 1, 1], [], []>} : vector<16x32xf32>, vector<32x128xf32>, vector<16x128xf32> -> vector<16x128xf32>
    %c0_3 = arith.constant 0 : index
    %c0_4 = arith.constant 0 : index
    %3 = vector.load %arg5[%c0_3, %c0_4] : memref<1x128xf32, #tpu.memory_space<vmem>>, vector<1x128xf32>
    %4 = vector.broadcast %3 : vector<1x128xf32> to vector<16x128xf32>
    %5 = arith.addf %2, %4 : vector<16x128xf32>
    %cst_5 = arith.constant 0.000000e+00 : f32
    %6 = vector.broadcast %cst_5 : f32 to vector<16x128xf32>
    %7 = arith.maximumf %5, %6 : vector<16x128xf32>
    %c0_6 = arith.constant 0 : index
    %c0_7 = arith.constant 0 : index
    %8 = vector.load %arg6[%c0_6, %c0_7] : memref<16x128xf32, #tpu.memory_space<vmem>>, vector<16x128xf32>
    tpu.vector_store %arg6[%c0_6, %c0_7], %7 {strides = array<i32>} : memref<16x128xf32, #tpu.memory_space<vmem>>, vector<16x128xf32>,
    return
  }
  func.func @transform_0(%arg0: i32, %arg1: i32, %arg2: i32) -> (i32, i32) {
    %c0_i32 = arith.constant 0 : i32
    return %arg0, %arg2 : i32, i32
  }
  func.func @transform_1(%arg0: i32, %arg1: i32, %arg2: i32) -> (i32, i32) {
    %c0_i32 = arith.constant 0 : i32
    return %arg2, %arg1 : i32, i32
  }
  func.func @transform_2(%arg0: i32, %arg1: i32, %arg2: i32) -> (i32, i32) {
    %c0_i32 = arith.constant 0 : i32
    %c0_i32_0 = arith.constant 0 : i32
    return %c0_i32, %arg1 : i32, i32
  }
  func.func @transform_3(%arg0: i32, %arg1: i32, %arg2: i32) -> (i32, i32) {
    %c0_i32 = arith.constant 0 : i32
    return %arg0, %arg1 : i32, i32
  }
}

</mosaic_0001>

<llo_original>
// kernel: tpu_custom_call.1
$region0: #{tpu_custom_call.1}
  #allocation0 [shape = 'u32[]', space=smem, size = 0x4, offset = 0x4, fixed_abs, tag = 'smem constant byte address 0x4 - core index']
  #allocation1 [shape = 'u32[144,128]{1,0:T(1,128)}', space=vmem, size = 0x12000, scoped, tag = 'internal scratch']
  %s0 = inlined_call_operand.hbm [shape: f32[16,32], index: 0, kind: input, shape index: {}]
  %s1 = inlined_call_operand.hbm [shape: f32[32,128], index: 1, kind: input, shape index: {}]
  %s2 = inlined_call_operand.vmem [shape: f32[1,128], index: 2, kind: input, shape index: {}]
  %s3 = inlined_call_operand.hbm [shape: f32[16,128], index: 3, kind: output, shape index: {}]
  %s4 = sld [smem:[#allocation0]]
  $region30: #{tpu_custom_call.1} parent=0
    _
  %s6 = ssub.s32 1, %s4
  %s7 = scalar_select 0, %s6, %s4
  $region1: #{tpu_custom_call.1} parent=0
    #allocation2 [shape = 'u8[8192]{0}', space=vmem, size = 0x2000, scoped, tag = 'input window, operand 0, single buffered']
    #allocation3 [shape = 's32[1]{0}', space=sflag, size = 0x4, scoped, tag = 'scoped memory for tpu_custom_call.1']
    #allocation4 [shape = 's32[1]{0}', space=sflag, size = 0x4, scoped, tag = 'scoped memory for tpu_custom_call.1']
    #allocation5 [shape = 'u8[16384]{0}', space=vmem, size = 0x4000, scoped, tag = 'input window, operand 1, single buffered']
    #allocation6 [shape = 's32[1]{0}', space=sflag, size = 0x4, scoped, tag = 'scoped memory for tpu_custom_call.1']
    #allocation7 [shape = 'u8[8192]{0}', space=vmem, size = 0x2000, scoped, tag = 'output window, operand 0, single buffered']
    %8 = vsyncpa [#allocation3], 0
    %9 = vsyncpa [#allocation6], 0
    %10 = vsyncpa [#allocation4], 0
    // Predicated region
    $region2: #{tpu_custom_call.1} parent=1 // pred_check
      _
    $region3: #{tpu_custom_call.1} parent=1 // pred_check_branch
      %12 = sbr.rel (0) target = $region5
    $region4: #{tpu_custom_call.1} parent=1 // pred_region
      %s14 = ssub.s32 256, 256
      %15 = vsyncadd [#allocation3], %s14
      %s16 = sshll.u32 [#allocation2], 4
      %s17 = int_to_ptr.vmem [resolvable:$true] %s16
      %22 = dma.hbm_to_vmem [thread:$0]  %s0, 256, %s17, [#allocation3], 128, 128, 8
    $region5: #{tpu_custom_call.1} parent=1 // pred_fallthru
      _
    // Predicated region
    $region6: #{tpu_custom_call.1} parent=1 // pred_check
      _
    $region7: #{tpu_custom_call.1} parent=1 // pred_check_branch
      %24 = sbr.rel (0) target = $region9
    $region8: #{tpu_custom_call.1} parent=1 // pred_region
      %s26 = ssub.s32 512, 512
      %27 = vsyncadd [#allocation6], %s26
      %s28 = sshll.u32 [#allocation5], 4
      %s29 = int_to_ptr.vmem [resolvable:$true] %s28
      %34 = dma.hbm_to_vmem [thread:$0]  %s1, 512, %s29, [#allocation6], 128, 128, 8
    $region9: #{tpu_custom_call.1} parent=1 // pred_fallthru
      _
    // Predicated region
    $region10: #{tpu_custom_call.1} parent=1 // pred_check
      _
    $region11: #{tpu_custom_call.1} parent=1 // pred_check_branch
      %36 = sbr.rel (0) target = $region13
    $region12: #{tpu_custom_call.1} parent=1 // pred_region
      _
    $region13: #{tpu_custom_call.1} parent=1 // pred_fallthru
      _
    // Predicated region
    $region14: #{tpu_custom_call.1} parent=1 // pred_check
      _
    $region15: #{tpu_custom_call.1} parent=1 // pred_check_branch
      %38 = sbr.rel (0) target = $region17
    $region16: #{tpu_custom_call.1} parent=1 // pred_region
      %39 = dma.done [#allocation3], 256
    $region17: #{tpu_custom_call.1} parent=1 // pred_fallthru
      _
    // Predicated region
    $region18: #{tpu_custom_call.1} parent=1 // pred_check
      _
    $region19: #{tpu_custom_call.1} parent=1 // pred_check_branch
      %41 = sbr.rel (0) target = $region21
    $region20: #{tpu_custom_call.1} parent=1 // pred_region
      %42 = dma.done [#allocation6], 512
    $region21: #{tpu_custom_call.1} parent=1 // pred_fallthru
      _
    %v43 = vld [vmem:[#allocation2] sm:$0xff]
    %v44 = vld [vmem:[#allocation2 + $0x8] sm:$0xff]
    %v45 = vld [vmem:[#allocation5] sm:$0xff]
    %v46 = vld [vmem:[#allocation5 + $0x8] sm:$0xff]
    %v47 = vld [vmem:[#allocation5 + $0x10] sm:$0xff]
    %v48 = vld [vmem:[#allocation5 + $0x18] sm:$0xff]
    %v49 = vld [vmem:[%s2] sm:$0x1]
    %v51 = vlaneseq
    %v52 = vshrl.u32 %v51, 7
    %v53 = vsub.s32 0, %v52
    %v54 = vrot.slane %v49, %v53
    %vm56 = vcmask 261120
    %v58 = vsel %vm56, %v43, 0
    %v61 = vsel %vm56, %v44, 0
    %63 = vmatprep.subr.mxu0 0.0
    %64 = vmatpush1.msra.mxu0 0.0
    %65 = vmatprep.subr.mxu0 0.0
    %66 = vmatpush1.msra.mxu0 0.0
    %67 = vmatprep.subr.mxu0 0.0
    %68 = vmatpush1.msra.mxu0 0.0
    %69 = vmatprep.subr.mxu0 0.0
    %70 = vmatpush1.msra.mxu0 0.0
    %71 = vmatprep.subr.mxu0 0.0
    %72 = vmatpush1.msra.mxu0 0.0
    %73 = vmatprep.subr.mxu0 0.0
    %74 = vmatpush1.msra.mxu0 0.0
    %75 = vmatprep.subr.mxu0 0.0
    %76 = vmatpush1.msra.mxu0 0.0
    %77 = vmatprep.subr.mxu0 0.0
    %78 = vmatpush1.msra.mxu0 0.0
    %79 = vmatprep.subr.mxu0 0.0
    %80 = vmatpush1.msra.mxu0 0.0
    %81 = vmatprep.subr.mxu0 0.0
    %82 = vmatpush1.msra.mxu0 0.0
    %83 = vmatprep.subr.mxu0 0.0
    %84 = vmatpush1.msra.mxu0 0.0
    %85 = vmatprep.subr.mxu0 0.0
    %86 = vmatpush1.msra.mxu0 0.0
    %87 = vmatprep.subr.mxu0 0.0
    %88 = vmatpush1.msra.mxu0 %v48
    %89 = vmatprep.subr.mxu0 0.0
    %90 = vmatpush1.msra.mxu0 %v47
    %91 = vmatprep.subr.mxu0 0.0
    %92 = vmatpush1.msra.mxu0 %v46
    %93 = vmatprep.subr.mxu0 0.0
    %94 = vmatpush1.msra.mxu0 %v45
    %95 = vmatprep.subr.mxu0 0.0
    %96 = vmatpush2.msra.mxu0 0.0
    %97 = vmatprep.subr.mxu0 0.0
    %98 = vmatpush2.msra.mxu0 0.0
    %99 = vmatprep.subr.mxu0 0.0
    %100 = vmatpush2.msra.mxu0 0.0
    %101 = vmatprep.subr.mxu0 0.0
    %102 = vmatpush2.msra.mxu0 0.0
    %103 = vmatprep.subr.mxu0 0.0
    %104 = vmatpush2.msra.mxu0 0.0
    %105 = vmatprep.subr.mxu0 0.0
    %106 = vmatpush2.msra.mxu0 0.0
    %107 = vmatprep.subr.mxu0 0.0
    %108 = vmatpush2.msra.mxu0 0.0
    %109 = vmatprep.subr.mxu0 0.0
    %110 = vmatpush2.msra.mxu0 0.0
    %111 = vmatprep.subr.mxu0 0.0
    %112 = vmatpush2.msra.mxu0 0.0
    %113 = vmatprep.subr.mxu0 0.0
    %114 = vmatpush2.msra.mxu0 0.0
    %115 = vmatprep.subr.mxu0 0.0
    %116 = vmatpush2.msra.mxu0 0.0
    %117 = vmatprep.subr.mxu0 0.0
    %118 = vmatpush2.msra.mxu0 0.0
    %119 = vmatprep.subr.mxu0 0.0
    %120 = vmatpush2.msra.mxu0 0.0
    %121 = vmatprep.subr.mxu0 0.0
    %122 = vmatpush2.msra.mxu0 0.0
    %123 = vmatprep.subr.mxu0 0.0
    %124 = vmatpush2.msra.mxu0 0.0
    %125 = vmatprep.subr.mxu0 0.0
    %126 = vmatpush2.msra.mxu0 0.0
    %127 = vmatprep.mubr.f32.mxu0 0.0
    %128 = vmatmul.mubr.f32.gmra.mxu0 %v58
    %v129 = vpop.f32.mrf.mxu0
    %v130 = vadd.f32 %v54, %v129
    %v131 = vpop.f32.mrf.mxu0
    %132 = vmatprep.mubr.f32.mxu0 0.0
    %133 = vmatmul.mubr.f32.gmra.mxu0 %v61
    %v134 = vpop.f32.mrf.mxu0
    %v135 = vadd.f32 %v54, %v134
    %v136 = vpop.f32.mrf.mxu0
    %137 = vdwg.mxu0
    %v138 = vmax.f32 %v130, 0.0
    %v139 = vmax.f32 %v135, 0.0
    %140 = vst [vmem:[#allocation7] sm:$0xff] %v138
    %141 = vst [vmem:[#allocation7 + $0x8] sm:$0xff] %v139
    // Predicated region
    $region22: #{tpu_custom_call.1} parent=1 // pred_check
      _
    $region23: #{tpu_custom_call.1} parent=1 // pred_check_branch
      %143 = sbr.rel (0) target = $region25
    $region24: #{tpu_custom_call.1} parent=1 // pred_region
      %s145 = ssub.s32 256, 256
      %146 = vsyncadd [#allocation4], %s145
      %s147 = sshll.u32 [#allocation7], 4
      %s148 = int_to_ptr.vmem [resolvable:$true] %s147
      %153 = dma.vmem_to_hbm [thread:$0]  %s148, 256, %s3, [#allocation4], 128, 128, 8
    $region25: #{tpu_custom_call.1} parent=1 // pred_fallthru
      _
    // Predicated region
    $region26: #{tpu_custom_call.1} parent=1 // pred_check
      _
    $region27: #{tpu_custom_call.1} parent=1 // pred_check_branch
      %155 = sbr.rel (0) target = $region29
    $region28: #{tpu_custom_call.1} parent=1 // pred_region
      %156 = dma.done [#allocation4], 256
    $region29: #{tpu_custom_call.1} parent=1 // pred_fallthru
      _
    %157 = vsyncpa [#allocation3], 1
    %158 = vsyncpa [#allocation6], 1
    %159 = vsyncpa [#allocation4], 1

</llo_original>
